<compile_context>
chip_gen: v7x
topology: tpu7x:2x2x1
jax: 0.10.0
libtpu: 0.0.40
codegen_flags: <defaults>
</compile_context>

<pallas_src>
import functools

import jax
import jax.numpy as jnp
from jax.experimental import pallas as pl
from jax.experimental.pallas import tpu as pltpu


@functools.cache
def _dft2_matrix(H: int, W: int) -> jax.Array:
    """Concatenated [Mr | Mi] (shape (H*W, 2*H*W), bf16) for the 2-D forward DFT
    acting on row-major flattened (H, W) images:
        M[h*W + w, h'*W + w'] = exp(-2*pi*i*(h*h'/H + w*w'/W)) = Mr + i*Mi.
    Mr and Mi are symmetric and M_inv = conj(M)/(H*W), so the same matrix serves
    both the forward transform and the real part of the inverse transform.
    Cached so eager callers never recompute the cos/sin table per forward.
    """
    h = jnp.arange(H, dtype=jnp.float32)
    w = jnp.arange(W, dtype=jnp.float32)
    th_h = 2.0 * jnp.pi * jnp.outer(h, h) / H            # (H, H)
    th_w = 2.0 * jnp.pi * jnp.outer(w, w) / W            # (W, W)
    theta = (th_h[:, None, :, None] + th_w[None, :, None, :]).reshape(H * W, H * W)
    m = jnp.concatenate([jnp.cos(theta), -jnp.sin(theta)], axis=1)   # (HW, 2*HW)
    return jax.device_put(m.astype(jnp.bfloat16))


def _mask_kernel(x_ref, w_ref, m_ref, o_ref, *, hw: int):
    # x_ref: (N, HW) bf16 | w_ref: (N, HW) f32 (pre-scaled by 1/(H*W))
    # m_ref: (HW, 2*HW) bf16 = [Mr | Mi] | o_ref: (N, HW) f32
    x = x_ref[...]
    m = m_ref[...]
    w = w_ref[...]

    # Fused forward 2-D DFT: one bf16 MXU matmul, f32 accumulation.
    y = jnp.dot(x, m, preferred_element_type=jnp.float32)          # (N, 2*HW)

    # Frequency-domain mask (1/(H*W) already folded into w); lane slices at
    # multiples of 128 are free.
    yr = (y[:, :hw] * w).astype(m.dtype)
    yi = (y[:, hw:] * w).astype(m.dtype)

    # Real part of the inverse 2-D DFT, reusing lane-sliced views of the same
    # matrix (Mr, Mi symmetric; M_inv = conj(M)/(H*W)):
    #   Re(Y_w @ M_inv) = (Yr_w @ Mr + Yi_w @ Mi) / (H*W)
    z = jnp.dot(yr, m[:, :hw], preferred_element_type=jnp.float32)
    z = z + jnp.dot(yi, m[:, hw:], preferred_element_type=jnp.float32)

    o_ref[...] = z.astype(o_ref.dtype)


def mask_forward(x: jax.Array, weight: jax.Array) -> jax.Array:
    """x: (B, C, H, W) float32, weight: (1, C, H, W) float32 -> (B, C, H, W) f32."""
    B, C, H, W = x.shape
    assert weight.shape == (1, C, H, W)
    N, HW = B * C, H * W
    # Layout assumptions for lane/sublane-clean blocks and free lane slices.
    assert HW % 128 == 0, "H*W must be a multiple of 128 for this kernel"
    assert N % 8 == 0, "B*C must be a multiple of 8 for this kernel"

    m = _dft2_matrix(H, W)                                          # cached bf16

    # Lane-dense flattening; bf16 operand for the bf16 MXU path.
    x_flat = x.reshape(N, HW).astype(jnp.bfloat16)
    # Mask with 1/(H*W) folded in. The broadcast over B is an 8 KB op fused
    # under jit (kept out of the kernel to avoid an unaligned sublane broadcast).
    w_flat = jnp.tile(weight.reshape(C, HW).astype(jnp.float32) * (1.0 / HW), (B, 1))

    kernel = functools.partial(_mask_kernel, hw=HW)

    out_flat = pl.pallas_call(
        kernel,
        out_shape=jax.ShapeDtypeStruct((N, HW), jnp.float32),
        grid_spec=pltpu.PrefetchScalarGridSpec(
            num_scalar_prefetch=0,
            grid=(1,),                                   # single step: no pipeline overhead
            in_specs=[
                pl.BlockSpec((N, HW), lambda i: (0, 0)),        # x (bf16)
                pl.BlockSpec((N, HW), lambda i: (0, 0)),        # weight/HW (f32)
                pl.BlockSpec((HW, 2 * HW), lambda i: (0, 0)),   # [Mr | Mi] (bf16)
            ],
            out_specs=pl.BlockSpec((N, HW), lambda i: (0, 0)),
        ),
        compiler_params=pltpu.CompilerParams(
            dimension_semantics=("arbitrary",)),
    )(x_flat, w_flat, m)

    return out_flat.reshape(B, C, H, W)


if __name__ == "__main__":
    # Small shapes consistent with the module: mask_size = (C, H, W) = (4, 16, 16)
    B, C, H, W = 2, 4, 16, 16

    key = jax.random.PRNGKey(0)
    x = jax.random.normal(key, (B, C, H, W), dtype=jnp.float32)

    # Parameter init exactly as the module's __init__: ones of shape (1, C, H, W).
    weight = jnp.ones((1, C, H, W), dtype=jnp.float32)

    fwd = jax.jit(mask_forward)
    out = jax.block_until_ready(fwd(x, weight))

    # Reference: pure-JAX version of the PyTorch forward (f32 FFT).
    ref = jnp.fft.ifft2(weight * jnp.fft.fft2(x)).real.astype(jnp.float32)
    assert out.shape == ref.shape and out.dtype == ref.dtype

    # bf16 MXU operands (f32 accumulation): error is bounded by bf16 quantization
    # of x and the DFT matrices -> allow a bf16-level tolerance.
    max_abs = float(jnp.max(jnp.abs(out - ref)))
    rel_l2 = float(jnp.linalg.norm(out - ref) / jnp.linalg.norm(ref))
    assert max_abs < 2.5e-2, f"max abs err {max_abs}"
    assert rel_l2 < 1e-2, f"rel l2 err {rel_l2}"

    print("KERNEL_OK")
</pallas_src>

<mosaic_0001>
module attributes {stable_mosaic.version = 11 : i64} {
  func.func @_mask_kernel(%arg0: i32, %arg1: memref<8x256xbf16, #tpu.memory_space<vmem>>, %arg2: memref<8x256xf32, #tpu.memory_space<vmem>>, %arg3: memref<256x512xbf16, #tpu.memory_space<vmem>>, %arg4: memref<8x256xf32, #tpu.memory_space<vmem>>) attributes {dimension_semantics = [#tpu.dimension_semantics<arbitrary>], iteration_bounds = array<i64: 1>, scalar_prefetch = 0 : i64, scratch_operands = 0 : i64, tpu.core_type = #tpu.core_type<tc>, window_params = [{pipeline_mode = #tpu.pipeline_mode<synchronous>, transform_indices = @transform_0, window_bounds = array<i64: 8, 256>}, {pipeline_mode = #tpu.pipeline_mode<synchronous>, transform_indices = @transform_1, window_bounds = array<i64: 8, 256>}, {pipeline_mode = #tpu.pipeline_mode<synchronous>, transform_indices = @transform_2, window_bounds = array<i64: 256, 512>}, {pipeline_mode = #tpu.pipeline_mode<synchronous>, transform_indices = @transform_3, window_bounds = array<i64: 8, 256>}]} {
    %c0 = arith.constant 0 : index
    %c0_0 = arith.constant 0 : index
    %0 = vector.load %arg1[%c0, %c0_0] : memref<8x256xbf16, #tpu.memory_space<vmem>>, vector<8x256xbf16>
    %c0_1 = arith.constant 0 : index
    %c0_2 = arith.constant 0 : index
    %1 = vector.load %arg3[%c0_1, %c0_2] : memref<256x512xbf16, #tpu.memory_space<vmem>>, vector<256x512xbf16>
    %c0_3 = arith.constant 0 : index
    %c0_4 = arith.constant 0 : index
    %2 = vector.load %arg2[%c0_3, %c0_4] : memref<8x256xf32, #tpu.memory_space<vmem>>, vector<8x256xf32>
    %cst = arith.constant dense<0.000000e+00> : vector<8x512xf32>
    %3 = tpu.matmul %0, %1, %cst {dimension_numbers = #tpu.dot_dimension_numbers<[1], [0], [0], [1], [0, 0, 1, 1], [], []>} : vector<8x256xbf16>, vector<256x512xbf16>, vector<8x512xf32> -> vector<8x512xf32>
    %4 = vector.extract_strided_slice %3 {offsets = [0, 0], sizes = [8, 256], strides = [1, 1]} : vector<8x512xf32> to vector<8x256xf32>
    %5 = arith.mulf %4, %2 : vector<8x256xf32>
    %6 = arith.truncf %5 : vector<8x256xf32> to vector<8x256xbf16>
    %7 = vector.extract_strided_slice %3 {offsets = [0, 256], sizes = [8, 256], strides = [1, 1]} : vector<8x512xf32> to vector<8x256xf32>
    %8 = arith.mulf %7, %2 : vector<8x256xf32>
    %9 = arith.truncf %8 : vector<8x256xf32> to vector<8x256xbf16>
    %10 = vector.extract_strided_slice %1 {offsets = [0, 0], sizes = [256, 256], strides = [1, 1]} : vector<256x512xbf16> to vector<256x256xbf16>
    %cst_5 = arith.constant dense<0.000000e+00> : vector<8x256xf32>
    %11 = tpu.matmul %6, %10, %cst_5 {dimension_numbers = #tpu.dot_dimension_numbers<[1], [0], [0], [1], [0, 0, 1, 1], [], []>} : vector<8x256xbf16>, vector<256x256xbf16>, vector<8x256xf32> -> vector<8x256xf32>
    %12 = vector.extract_strided_slice %1 {offsets = [0, 256], sizes = [256, 256], strides = [1, 1]} : vector<256x512xbf16> to vector<256x256xbf16>
    %cst_6 = arith.constant dense<0.000000e+00> : vector<8x256xf32>
    %13 = tpu.matmul %9, %12, %cst_6 {dimension_numbers = #tpu.dot_dimension_numbers<[1], [0], [0], [1], [0, 0, 1, 1], [], []>} : vector<8x256xbf16>, vector<256x256xbf16>, vector<8x256xf32> -> vector<8x256xf32>
    %14 = arith.addf %11, %13 : vector<8x256xf32>
    %c0_7 = arith.constant 0 : index
    %c0_8 = arith.constant 0 : index
    %15 = vector.load %arg4[%c0_7, %c0_8] : memref<8x256xf32, #tpu.memory_space<vmem>>, vector<8x256xf32>
    tpu.vector_store %arg4[%c0_7, %c0_8], %14 {strides = array<i32>} : memref<8x256xf32, #tpu.memory_space<vmem>>, vector<8x256xf32>,
    return
  }
  func.func @transform_0(%arg0: i32) -> (i32, i32) {
    %c0_i32 = arith.constant 0 : i32
    %c0_i32_0 = arith.constant 0 : i32
    %c0_i32_1 = arith.constant 0 : i32
    return %c0_i32, %c0_i32_0 : i32, i32
  }
  func.func @transform_1(%arg0: i32) -> (i32, i32) {
    %c0_i32 = arith.constant 0 : i32
    %c0_i32_0 = arith.constant 0 : i32
    %c0_i32_1 = arith.constant 0 : i32
    return %c0_i32, %c0_i32_0 : i32, i32
  }
  func.func @transform_2(%arg0: i32) -> (i32, i32) {
    %c0_i32 = arith.constant 0 : i32
    %c0_i32_0 = arith.constant 0 : i32
    %c0_i32_1 = arith.constant 0 : i32
    return %c0_i32, %c0_i32_0 : i32, i32
  }
  func.func @transform_3(%arg0: i32) -> (i32, i32) {
    %c0_i32 = arith.constant 0 : i32
    %c0_i32_0 = arith.constant 0 : i32
    %c0_i32_1 = arith.constant 0 : i32
    return %c0_i32, %c0_i32_0 : i32, i32
  }
}

</mosaic_0001>

<llo_original>
// kernel: tile.9
$region0: #{tile.9}
  %s0 = inlined_call_operand.vmem [shape: f32[2,4,256], index: 0, kind: input, shape index: {}]
  %s1 = inlined_call_operand.vmem [shape: f32[8,256], index: 1, kind: output, shape index: {}]
  $region1: #{tile.9} parent=0
    #allocation0 [shape = 'u8[16384]{0}', space=vmem, size = 0x4000, scoped, tag = 'scoped mem for input reshape']
    %s3 = sshllo.u32 0, 4
    %s4 = smul.addr 4, 3
    %s5 = scalar_lea.vmem %s0, %s4
    %v6 = vld [vmem:[%s5] sm:%s3]
    %s7 = scalar_lea.vmem [#allocation0], 24
    %8 = vst [vmem:[%s7] sm:%s3] %v6
    %s9 = smul.addr 4, 2
    %s10 = scalar_lea.vmem %s0, %s9
    %v11 = vld [vmem:[%s10] sm:%s3]
    %s12 = scalar_lea.vmem [#allocation0], 16
    %13 = vst [vmem:[%s12] sm:%s3] %v11
    %s14 = scalar_lea.vmem %s0, 4
    %v15 = vld [vmem:[%s14] sm:%s3]
    %s16 = scalar_lea.vmem [#allocation0], 8
    %17 = vst [vmem:[%s16] sm:%s3] %v15
    %v18 = vld [vmem:[%s0] sm:%s3]
    %19 = vst [vmem:[#allocation0] sm:%s3] %v18
    %v20 = vld [vmem:[#allocation0] sm:$0xf]
    %21 = vst [vmem:[%s1] sm:$0xf] %v20
    %s22 = scalar_lea.vmem [#allocation0], 8
    %v23 = vld [vmem:[%s22] sm:$0xf]
    %s24 = scalar_lea.vmem %s1, 8
    %25 = vst [vmem:[%s24] sm:$0xf] %v23
    %s26 = scalar_lea.vmem [#allocation0], 16
    %v27 = vld [vmem:[%s26] sm:$0xf]
    %s28 = scalar_lea.vmem %s1, 4
    %29 = vst [vmem:[%s28] sm:$0xf] %v27
    %s30 = scalar_lea.vmem [#allocation0], 24
    %v31 = vld [vmem:[%s30] sm:$0xf]
    %s32 = scalar_lea.vmem %s1, 12
    %33 = vst [vmem:[%s32] sm:$0xf] %v31

// kernel: mask_forward.1
$region0: #{mask_forward.1}
  #allocation0 [shape = 'u32[]', space=smem, size = 0x4, offset = 0x4, fixed_abs, tag = 'smem constant byte address 0x4 - core index']
  #allocation1 [shape = 'u32[144,128]{1,0:T(1,128)}', space=vmem, size = 0x12000, scoped, tag = 'internal scratch']
  %s0 = inlined_call_operand.vmem [shape: bf16[8,256], index: 0, kind: input, shape index: {}]
  %s1 = inlined_call_operand.vmem [shape: f32[8,256], index: 1, kind: input, shape index: {}]
  %s2 = inlined_call_operand.vmem [shape: bf16[256,512], index: 2, kind: input, shape index: {}]
  %s3 = inlined_call_operand.vmem [shape: f32[8,256], index: 3, kind: output, shape index: {}]
  %s4 = sld [smem:[#allocation0]]
  $region22: #{mask_forward.1} parent=0
    _
  %s6 = ssub.s32 1, %s4
  %s7 = scalar_select 0, %s6, %s4
  // Predicated region
  $region2: #{mask_forward.1} parent=0 // pred_check
    _
  $region3: #{mask_forward.1} parent=0 // pred_check_branch
    %9 = sbr.rel (0) target = $region5
  $region4: #{mask_forward.1} parent=0 // pred_region
    _
  $region5: #{mask_forward.1} parent=0 // pred_fallthru
    _
  // Predicated region
  $region6: #{mask_forward.1} parent=0 // pred_check
    _
  $region7: #{mask_forward.1} parent=0 // pred_check_branch
    %11 = sbr.rel (0) target = $region9
  $region8: #{mask_forward.1} parent=0 // pred_region
    _
  $region9: #{mask_forward.1} parent=0 // pred_fallthru
    _
  // Predicated region
  $region10: #{mask_forward.1} parent=0 // pred_check
    _
  $region11: #{mask_forward.1} parent=0 // pred_check_branch
    %13 = sbr.rel (0) target = $region13
  $region12: #{mask_forward.1} parent=0 // pred_region
    _
  $region13: #{mask_forward.1} parent=0 // pred_fallthru
    _
  %v14 = vld [vmem:[%s0] sm:$0xff]
  %v15 = vld [vmem:[%s2] sm:$0xff]
  %v16 = vld [vmem:[%s2 + $0x8] sm:$0xff]
  %v17 = vld [vmem:[%s2 + $0x10] sm:$0xff]
  %v18 = vld [vmem:[%s2 + $0x18] sm:$0xff]
  %v19 = vld [vmem:[%s2 + $0x20] sm:$0xff]
  %v20 = vld [vmem:[%s2 + $0x28] sm:$0xff]
  %v21 = vld [vmem:[%s2 + $0x30] sm:$0xff]
  %v22 = vld [vmem:[%s2 + $0x38] sm:$0xff]
  %v23 = vld [vmem:[%s2 + $0x40] sm:$0xff]
  %v24 = vld [vmem:[%s2 + $0x48] sm:$0xff]
  %v25 = vld [vmem:[%s2 + $0x50] sm:$0xff]
  %v26 = vld [vmem:[%s2 + $0x58] sm:$0xff]
  %v27 = vld [vmem:[%s2 + $0x60] sm:$0xff]
  %v28 = vld [vmem:[%s2 + $0x68] sm:$0xff]
  %v29 = vld [vmem:[%s2 + $0x70] sm:$0xff]
  %v30 = vld [vmem:[%s2 + $0x78] sm:$0xff]
  %v31 = vld [vmem:[%s2 + $0x80] sm:$0xff]
  %v32 = vld [vmem:[%s2 + $0x88] sm:$0xff]
  %v33 = vld [vmem:[%s2 + $0x90] sm:$0xff]
  %v34 = vld [vmem:[%s2 + $0x98] sm:$0xff]
  %v35 = vld [vmem:[%s2 + $0xa0] sm:$0xff]
  %v36 = vld [vmem:[%s2 + $0xa8] sm:$0xff]
  %v37 = vld [vmem:[%s2 + $0xb0] sm:$0xff]
  %v38 = vld [vmem:[%s2 + $0xb8] sm:$0xff]
  %v39 = vld [vmem:[%s2 + $0xc0] sm:$0xff]
  %v40 = vld [vmem:[%s2 + $0xc8] sm:$0xff]
  %v41 = vld [vmem:[%s2 + $0xd0] sm:$0xff]
  %v42 = vld [vmem:[%s2 + $0xd8] sm:$0xff]
  %v43 = vld [vmem:[%s2 + $0xe0] sm:$0xff]
  %v44 = vld [vmem:[%s2 + $0xe8] sm:$0xff]
  %v45 = vld [vmem:[%s2 + $0xf0] sm:$0xff]
  %v46 = vld [vmem:[%s2 + $0xf8] sm:$0xff]
  %v47 = vld [vmem:[%s2 + $0x100] sm:$0xff]
  %v48 = vld [vmem:[%s2 + $0x108] sm:$0xff]
  %v49 = vld [vmem:[%s2 + $0x110] sm:$0xff]
  %v50 = vld [vmem:[%s2 + $0x118] sm:$0xff]
  %v51 = vld [vmem:[%s2 + $0x120] sm:$0xff]
  %v52 = vld [vmem:[%s2 + $0x128] sm:$0xff]
  %v53 = vld [vmem:[%s2 + $0x130] sm:$0xff]
  %v54 = vld [vmem:[%s2 + $0x138] sm:$0xff]
  %v55 = vld [vmem:[%s2 + $0x140] sm:$0xff]
  %v56 = vld [vmem:[%s2 + $0x148] sm:$0xff]
  %v57 = vld [vmem:[%s2 + $0x150] sm:$0xff]
  %v58 = vld [vmem:[%s2 + $0x158] sm:$0xff]
  %v59 = vld [vmem:[%s2 + $0x160] sm:$0xff]
  %v60 = vld [vmem:[%s2 + $0x168] sm:$0xff]
  %v61 = vld [vmem:[%s2 + $0x170] sm:$0xff]
  %v62 = vld [vmem:[%s2 + $0x178] sm:$0xff]
  %v63 = vld [vmem:[%s2 + $0x180] sm:$0xff]
  %v64 = vld [vmem:[%s2 + $0x188] sm:$0xff]
  %v65 = vld [vmem:[%s2 + $0x190] sm:$0xff]
  %v66 = vld [vmem:[%s2 + $0x198] sm:$0xff]
  %v67 = vld [vmem:[%s2 + $0x1a0] sm:$0xff]
  %v68 = vld [vmem:[%s2 + $0x1a8] sm:$0xff]
  %v69 = vld [vmem:[%s2 + $0x1b0] sm:$0xff]
  %v70 = vld [vmem:[%s2 + $0x1b8] sm:$0xff]
  %v71 = vld [vmem:[%s2 + $0x1c0] sm:$0xff]
  %v72 = vld [vmem:[%s2 + $0x1c8] sm:$0xff]
  %v73 = vld [vmem:[%s2 + $0x1d0] sm:$0xff]
  %v74 = vld [vmem:[%s2 + $0x1d8] sm:$0xff]
  %v75 = vld [vmem:[%s2 + $0x1e0] sm:$0xff]
  %v76 = vld [vmem:[%s2 + $0x1e8] sm:$0xff]
  %v77 = vld [vmem:[%s2 + $0x1f0] sm:$0xff]
  %v78 = vld [vmem:[%s2 + $0x1f8] sm:$0xff]
  %v79 = vld [vmem:[%s1] sm:$0xff]
  %v80 = vld [vmem:[%s1 + $0x8] sm:$0xff]
  %v82 = vunpack.c.l.b16 %v14
  %v83 = vunpack.c.h.b16 %v14
  %v84 = vpack.c.b16 %v82, %v82
  %v85 = vpack.c.b16 %v83, %v83
  %v152 = vunpack.c.l.b16 %v15
  %v153 = vunpack.c.h.b16 %v15
  %v154 = vunpack.c.l.b16 %v16
  %v155 = vunpack.c.h.b16 %v16
  %v156 = vunpack.c.l.b16 %v17
  %v157 = vunpack.c.h.b16 %v17
  %v158 = vunpack.c.l.b16 %v18
  %v159 = vunpack.c.h.b16 %v18
  %v160 = vunpack.c.l.b16 %v19
  %v161 = vunpack.c.h.b16 %v19
  %v162 = vunpack.c.l.b16 %v20
  %v163 = vunpack.c.h.b16 %v20
  %v164 = vunpack.c.l.b16 %v21
  %v165 = vunpack.c.h.b16 %v21
  %v166 = vunpack.c.l.b16 %v22
  %v167 = vunpack.c.h.b16 %v22
  %v168 = vunpack.c.l.b16 %v23
  %v169 = vunpack.c.h.b16 %v23
  %v170 = vunpack.c.l.b16 %v24
  %v171 = vunpack.c.h.b16 %v24
  %v172 = vunpack.c.l.b16 %v25
  %v173 = vunpack.c.h.b16 %v25
  %v174 = vunpack.c.l.b16 %v26
  %v175 = vunpack.c.h.b16 %v26
  %v176 = vunpack.c.l.b16 %v27
  %v177 = vunpack.c.h.b16 %v27
  %v178 = vunpack.c.l.b16 %v28
  %v179 = vunpack.c.h.b16 %v28
  %v180 = vunpack.c.l.b16 %v29
  %v181 = vunpack.c.h.b16 %v29
  %v182 = vunpack.c.l.b16 %v30
  %v183 = vunpack.c.h.b16 %v30
  %v184 = vunpack.c.l.b16 %v31
  %v185 = vunpack.c.h.b16 %v31
  %v186 = vunpack.c.l.b16 %v32
  %v187 = vunpack.c.h.b16 %v32
  %v188 = vunpack.c.l.b16 %v33
  %v189 = vunpack.c.h.b16 %v33
  %v190 = vunpack.c.l.b16 %v34
  %v191 = vunpack.c.h.b16 %v34
  %v192 = vunpack.c.l.b16 %v35
  %v193 = vunpack.c.h.b16 %v35
  %v194 = vunpack.c.l.b16 %v36
  %v195 = vunpack.c.h.b16 %v36
  %v196 = vunpack.c.l.b16 %v37
  %v197 = vunpack.c.h.b16 %v37
  %v198 = vunpack.c.l.b16 %v38
  %v199 = vunpack.c.h.b16 %v38
  %v200 = vunpack.c.l.b16 %v39
  %v201 = vunpack.c.h.b16 %v39
  %v202 = vunpack.c.l.b16 %v40
  %v203 = vunpack.c.h.b16 %v40
  %v204 = vunpack.c.l.b16 %v41
  %v205 = vunpack.c.h.b16 %v41
  %v206 = vunpack.c.l.b16 %v42
  %v207 = vunpack.c.h.b16 %v42
  %v208 = vunpack.c.l.b16 %v43
  %v209 = vunpack.c.h.b16 %v43
  %v210 = vunpack.c.l.b16 %v44
  %v211 = vunpack.c.h.b16 %v44
  %v212 = vunpack.c.l.b16 %v45
  %v213 = vunpack.c.h.b16 %v45
  %v214 = vunpack.c.l.b16 %v46
  %v215 = vunpack.c.h.b16 %v46
  %v216 = vunpack.c.l.b16 %v47
  %v217 = vunpack.c.h.b16 %v47
  %v218 = vunpack.c.l.b16 %v48
  %v219 = vunpack.c.h.b16 %v48
  %v220 = vunpack.c.l.b16 %v49
  %v221 = vunpack.c.h.b16 %v49
  %v222 = vunpack.c.l.b16 %v50
  %v223 = vunpack.c.h.b16 %v50
  %v224 = vunpack.c.l.b16 %v51
  %v225 = vunpack.c.h.b16 %v51
  %v226 = vunpack.c.l.b16 %v52
  %v227 = vunpack.c.h.b16 %v52
  %v228 = vunpack.c.l.b16 %v53
  %v229 = vunpack.c.h.b16 %v53
  %v230 = vunpack.c.l.b16 %v54
  %v231 = vunpack.c.h.b16 %v54
  %v232 = vunpack.c.l.b16 %v55
  %v233 = vunpack.c.h.b16 %v55
  %v234 = vunpack.c.l.b16 %v56
  %v235 = vunpack.c.h.b16 %v56
  %v236 = vunpack.c.l.b16 %v57
  %v237 = vunpack.c.h.b16 %v57
  %v238 = vunpack.c.l.b16 %v58
  %v239 = vunpack.c.h.b16 %v58
  %v240 = vunpack.c.l.b16 %v59
  %v241 = vunpack.c.h.b16 %v59
  %v242 = vunpack.c.l.b16 %v60
  %v243 = vunpack.c.h.b16 %v60
  %v244 = vunpack.c.l.b16 %v61
  %v245 = vunpack.c.h.b16 %v61
  %v246 = vunpack.c.l.b16 %v62
  %v247 = vunpack.c.h.b16 %v62
  %v248 = vunpack.c.l.b16 %v63
  %v249 = vunpack.c.h.b16 %v63
  %v250 = vunpack.c.l.b16 %v64
  %v251 = vunpack.c.h.b16 %v64
  %v252 = vunpack.c.l.b16 %v65
  %v253 = vunpack.c.h.b16 %v65
  %v254 = vunpack.c.l.b16 %v66
  %v255 = vunpack.c.h.b16 %v66
  %v256 = vunpack.c.l.b16 %v67
  %v257 = vunpack.c.h.b16 %v67
  %v258 = vunpack.c.l.b16 %v68
  %v259 = vunpack.c.h.b16 %v68
  %v260 = vunpack.c.l.b16 %v69
  %v261 = vunpack.c.h.b16 %v69
  %v262 = vunpack.c.l.b16 %v70
  %v263 = vunpack.c.h.b16 %v70
  %v264 = vunpack.c.l.b16 %v71
  %v265 = vunpack.c.h.b16 %v71
  %v266 = vunpack.c.l.b16 %v72
  %v267 = vunpack.c.h.b16 %v72
  %v268 = vunpack.c.l.b16 %v73
  %v269 = vunpack.c.h.b16 %v73
  %v270 = vunpack.c.l.b16 %v74
  %v271 = vunpack.c.h.b16 %v74
  %v272 = vunpack.c.l.b16 %v75
  %v273 = vunpack.c.h.b16 %v75
  %v274 = vunpack.c.l.b16 %v76
  %v275 = vunpack.c.h.b16 %v76
  %v276 = vunpack.c.l.b16 %v77
  %v277 = vunpack.c.h.b16 %v77
  %v278 = vunpack.c.l.b16 %v78
  %v279 = vunpack.c.h.b16 %v78
  %v280 = vpack.c.b16 %v156, %v152
  %v281 = vpack.c.b16 %v157, %v153
  %v282 = vpack.c.b16 %v158, %v154
  %v283 = vpack.c.b16 %v159, %v155
  %v284 = vpack.c.b16 %v164, %v160
  %v285 = vpack.c.b16 %v165, %v161
  %v286 = vpack.c.b16 %v166, %v162
  %v287 = vpack.c.b16 %v167, %v163
  %v288 = vpack.c.b16 %v172, %v168
  %v289 = vpack.c.b16 %v173, %v169
  %v290 = vpack.c.b16 %v174, %v170
  %v291 = vpack.c.b16 %v175, %v171
  %v292 = vpack.c.b16 %v180, %v176
  %v293 = vpack.c.b16 %v181, %v177
  %v294 = vpack.c.b16 %v182, %v178
  %v295 = vpack.c.b16 %v183, %v179
  %v296 = vpack.c.b16 %v188, %v184
  %v297 = vpack.c.b16 %v189, %v185
  %v298 = vpack.c.b16 %v190, %v186
  %v299 = vpack.c.b16 %v191, %v187
  %v300 = vpack.c.b16 %v196, %v192
  %v301 = vpack.c.b16 %v197, %v193
  %v302 = vpack.c.b16 %v198, %v194
  %v303 = vpack.c.b16 %v199, %v195
  %v304 = vpack.c.b16 %v204, %v200
  %v305 = vpack.c.b16 %v205, %v201
  %v306 = vpack.c.b16 %v206, %v202
  %v307 = vpack.c.b16 %v207, %v203
  %v308 = vpack.c.b16 %v212, %v208
  %v309 = vpack.c.b16 %v213, %v209
  %v310 = vpack.c.b16 %v214, %v210
  %v311 = vpack.c.b16 %v215, %v211
  %v312 = vpack.c.b16 %v220, %v216
  %v313 = vpack.c.b16 %v221, %v217
  %v314 = vpack.c.b16 %v222, %v218
  %v315 = vpack.c.b16 %v223, %v219
  %v316 = vpack.c.b16 %v228, %v224
  %v317 = vpack.c.b16 %v229, %v225
  %v318 = vpack.c.b16 %v230, %v226
  %v319 = vpack.c.b16 %v231, %v227
  %v320 = vpack.c.b16 %v236, %v232
  %v321 = vpack.c.b16 %v237, %v233
  %v322 = vpack.c.b16 %v238, %v234
  %v323 = vpack.c.b16 %v239, %v235
  %v324 = vpack.c.b16 %v244, %v240
  %v325 = vpack.c.b16 %v245, %v241
  %v326 = vpack.c.b16 %v246, %v242
  %v327 = vpack.c.b16 %v247, %v243
  %v328 = vpack.c.b16 %v252, %v248
  %v329 = vpack.c.b16 %v253, %v249
  %v330 = vpack.c.b16 %v254, %v250
  %v331 = vpack.c.b16 %v255, %v251
  %v332 = vpack.c.b16 %v260, %v256
  %v333 = vpack.c.b16 %v261, %v257
  %v334 = vpack.c.b16 %v262, %v258
  %v335 = vpack.c.b16 %v263, %v259
  %v336 = vpack.c.b16 %v268, %v264
  %v337 = vpack.c.b16 %v269, %v265
  %v338 = vpack.c.b16 %v270, %v266
  %v339 = vpack.c.b16 %v271, %v267
  %v340 = vpack.c.b16 %v276, %v272
  %v341 = vpack.c.b16 %v277, %v273
  %v342 = vpack.c.b16 %v278, %v274
  %v343 = vpack.c.b16 %v279, %v275
  %408 = vmatprep.subr.bf16.mxu0 %v281
  %409 = vmatpush1.bf16.msra.mxu0 %v280
  %410 = vmatprep.subr.bf16.mxu0 %v285
  %411 = vmatpush1.bf16.msra.mxu0 %v284
  %412 = vmatprep.subr.bf16.mxu0 %v289
  %413 = vmatpush1.bf16.msra.mxu0 %v288
  %414 = vmatprep.subr.bf16.mxu0 %v293
  %415 = vmatpush1.bf16.msra.mxu0 %v292
  %416 = vmatprep.subr.bf16.mxu0 %v297
  %417 = vmatpush1.bf16.msra.mxu0 %v296
  %418 = vmatprep.subr.bf16.mxu0 %v301
  %419 = vmatpush1.bf16.msra.mxu0 %v300
  %420 = vmatprep.subr.bf16.mxu0 %v305
  %421 = vmatpush1.bf16.msra.mxu0 %v304
  %422 = vmatprep.subr.bf16.mxu0 %v309
  %423 = vmatpush1.bf16.msra.mxu0 %v308
  %424 = vmatprep.subr.bf16.mxu0 %v313
  %425 = vmatpush1.bf16.msra.mxu0 %v312
  %426 = vmatprep.subr.bf16.mxu0 %v317
  %427 = vmatpush1.bf16.msra.mxu0 %v316
  %428 = vmatprep.subr.bf16.mxu0 %v321
  %429 = vmatpush1.bf16.msra.mxu0 %v320
  %430 = vmatprep.subr.bf16.mxu0 %v325
  %431 = vmatpush1.bf16.msra.mxu0 %v324
  %432 = vmatprep.subr.bf16.mxu0 %v329
  %433 = vmatpush1.bf16.msra.mxu0 %v328
  %434 = vmatprep.subr.bf16.mxu0 %v333
  %435 = vmatpush1.bf16.msra.mxu0 %v332
  %436 = vmatprep.subr.bf16.mxu0 %v337
  %437 = vmatpush1.bf16.msra.mxu0 %v336
  %438 = vmatprep.subr.bf16.mxu0 %v341
  %439 = vmatpush1.bf16.msra.mxu0 %v340
  %440 = vmatprep.mubr.bf16.mxu0 %v85
  %441 = vmatmul.mubr.bf16.gmra.mrb[0].mxu0 %v84
  %v442 = vpop.f32.mrb[0].mxu0
  %v443 = vadd.f32 0.0, %v442
  %v444 = vpop.f32.mrb[0].mxu0
  %v445 = vadd.f32 0.0, %v444
  %v446 = vpop.f32.mrb[0].mxu0
  %v447 = vpop.f32.mrb[0].mxu0
  %448 = vdwg.mxu0
  %449 = vmatprep.subr.bf16.mxu0 %v283
  %450 = vmatpush1.bf16.msra.mxu0 %v282
  %451 = vmatprep.subr.bf16.mxu0 %v287
  %452 = vmatpush1.bf16.msra.mxu0 %v286
  %453 = vmatprep.subr.bf16.mxu0 %v291
  %454 = vmatpush1.bf16.msra.mxu0 %v290
  %455 = vmatprep.subr.bf16.mxu0 %v295
  %456 = vmatpush1.bf16.msra.mxu0 %v294
  %457 = vmatprep.subr.bf16.mxu0 %v299
  %458 = vmatpush1.bf16.msra.mxu0 %v298
  %459 = vmatprep.subr.bf16.mxu0 %v303
  %460 = vmatpush1.bf16.msra.mxu0 %v302
  %461 = vmatprep.subr.bf16.mxu0 %v307
  %462 = vmatpush1.bf16.msra.mxu0 %v306
  %463 = vmatprep.subr.bf16.mxu0 %v311
  %464 = vmatpush1.bf16.msra.mxu0 %v310
  %465 = vmatprep.subr.bf16.mxu0 %v315
  %466 = vmatpush1.bf16.msra.mxu0 %v314
  %467 = vmatprep.subr.bf16.mxu0 %v319
  %468 = vmatpush1.bf16.msra.mxu0 %v318
  %469 = vmatprep.subr.bf16.mxu0 %v323
  %470 = vmatpush1.bf16.msra.mxu0 %v322
  %471 = vmatprep.subr.bf16.mxu0 %v327
  %472 = vmatpush1.bf16.msra.mxu0 %v326
  %473 = vmatprep.subr.bf16.mxu0 %v331
  %474 = vmatpush1.bf16.msra.mxu0 %v330
  %475 = vmatprep.subr.bf16.mxu0 %v335
  %476 = vmatpush1.bf16.msra.mxu0 %v334
  %477 = vmatprep.subr.bf16.mxu0 %v339
  %478 = vmatpush1.bf16.msra.mxu0 %v338
  %479 = vmatprep.subr.bf16.mxu0 %v343
  %480 = vmatpush1.bf16.msra.mxu0 %v342
  %481 = vmatprep.mubr.bf16.mxu0 %v85
  %482 = vmatmul.mubr.bf16.gmra.mrb[0].mxu0 %v84
  %v483 = vpop.f32.mrb[0].mxu0
  %v484 = vadd.f32 0.0, %v483
  %v485 = vpop.f32.mrb[0].mxu0
  %v486 = vadd.f32 0.0, %v485
  %v487 = vpop.f32.mrb[0].mxu0
  %v488 = vpop.f32.mrb[0].mxu0
  %489 = vdwg.mxu0
  %v490 = vmul.f32 %v443, %v79
  %v491 = vmul.f32 %v445, %v80
  %v492 = vpack.c.bf16 %v490, %v490
  %v493 = vpack.c.bf16 %v491, %v491
  %v494 = vmul.f32 %v484, %v79
  %v495 = vmul.f32 %v486, %v80
  %v496 = vpack.c.bf16 %v494, %v494
  %v497 = vpack.c.bf16 %v495, %v495
  %498 = vmatprep.subr.bf16.mxu0 %v283
  %499 = vmatpush1.bf16.msra.mxu0 %v282
  %500 = vmatprep.subr.bf16.mxu0 %v287
  %501 = vmatpush1.bf16.msra.mxu0 %v286
  %502 = vmatprep.subr.bf16.mxu0 %v291
  %503 = vmatpush1.bf16.msra.mxu0 %v290
  %504 = vmatprep.subr.bf16.mxu0 %v295
  %505 = vmatpush1.bf16.msra.mxu0 %v294
  %506 = vmatprep.subr.bf16.mxu0 %v299
  %507 = vmatpush1.bf16.msra.mxu0 %v298
  %508 = vmatprep.subr.bf16.mxu0 %v303
  %509 = vmatpush1.bf16.msra.mxu0 %v302
  %510 = vmatprep.subr.bf16.mxu0 %v307
  %511 = vmatpush1.bf16.msra.mxu0 %v306
  %512 = vmatprep.subr.bf16.mxu0 %v311
  %513 = vmatpush1.bf16.msra.mxu0 %v310
  %514 = vmatprep.subr.bf16.mxu0 %v315
  %515 = vmatpush1.bf16.msra.mxu0 %v314
  %516 = vmatprep.subr.bf16.mxu0 %v319
  %517 = vmatpush1.bf16.msra.mxu0 %v318
  %518 = vmatprep.subr.bf16.mxu0 %v323
  %519 = vmatpush1.bf16.msra.mxu0 %v322
  %520 = vmatprep.subr.bf16.mxu0 %v327
  %521 = vmatpush1.bf16.msra.mxu0 %v326
  %522 = vmatprep.subr.bf16.mxu0 %v331
  %523 = vmatpush1.bf16.msra.mxu0 %v330
  %524 = vmatprep.subr.bf16.mxu0 %v335
  %525 = vmatpush1.bf16.msra.mxu0 %v334
  %526 = vmatprep.subr.bf16.mxu0 %v339
  %527 = vmatpush1.bf16.msra.mxu0 %v338
  %528 = vmatprep.subr.bf16.mxu0 %v343
  %529 = vmatpush1.bf16.msra.mxu0 %v342
  %530 = vmatprep.mubr.bf16.mxu0 %v497
  %531 = vmatmul.mubr.bf16.gmra.mrb[0].mxu0 %v496
  %v532 = vpop.f32.mrb[0].mxu0
  %v533 = vadd.f32 0.0, %v532
  %v534 = vpop.f32.mrb[0].mxu0
  %v535 = vadd.f32 0.0, %v534
  %v536 = vpop.f32.mrb[0].mxu0
  %v537 = vpop.f32.mrb[0].mxu0
  %538 = vdwg.mxu0
  %539 = vmatprep.subr.bf16.mxu0 %v281
  %540 = vmatpush1.bf16.msra.mxu0 %v280
  %541 = vmatprep.subr.bf16.mxu0 %v285
  %542 = vmatpush1.bf16.msra.mxu0 %v284
  %543 = vmatprep.subr.bf16.mxu0 %v289
  %544 = vmatpush1.bf16.msra.mxu0 %v288
  %545 = vmatprep.subr.bf16.mxu0 %v293
  %546 = vmatpush1.bf16.msra.mxu0 %v292
  %547 = vmatprep.subr.bf16.mxu0 %v297
  %548 = vmatpush1.bf16.msra.mxu0 %v296
  %549 = vmatprep.subr.bf16.mxu0 %v301
  %550 = vmatpush1.bf16.msra.mxu0 %v300
  %551 = vmatprep.subr.bf16.mxu0 %v305
  %552 = vmatpush1.bf16.msra.mxu0 %v304
  %553 = vmatprep.subr.bf16.mxu0 %v309
  %554 = vmatpush1.bf16.msra.mxu0 %v308
  %555 = vmatprep.subr.bf16.mxu0 %v313
  %556 = vmatpush1.bf16.msra.mxu0 %v312
  %557 = vmatprep.subr.bf16.mxu0 %v317
  %558 = vmatpush1.bf16.msra.mxu0 %v316
  %559 = vmatprep.subr.bf16.mxu0 %v321
  %560 = vmatpush1.bf16.msra.mxu0 %v320
  %561 = vmatprep.subr.bf16.mxu0 %v325
  %562 = vmatpush1.bf16.msra.mxu0 %v324
  %563 = vmatprep.subr.bf16.mxu0 %v329
  %564 = vmatpush1.bf16.msra.mxu0 %v328
  %565 = vmatprep.subr.bf16.mxu0 %v333
  %566 = vmatpush1.bf16.msra.mxu0 %v332
  %567 = vmatprep.subr.bf16.mxu0 %v337
  %568 = vmatpush1.bf16.msra.mxu0 %v336
  %569 = vmatprep.subr.bf16.mxu0 %v341
  %570 = vmatpush1.bf16.msra.mxu0 %v340
  %571 = vmatprep.mubr.bf16.mxu0 %v493
  %572 = vmatmul.mubr.bf16.gmra.mrb[0].mxu0 %v492
  %v573 = vpop.f32.mrb[0].mxu0
  %v574 = vadd.f32 %v533, %v573
  %v575 = vpop.f32.mrb[0].mxu0
  %v576 = vadd.f32 %v535, %v575
  %v577 = vpop.f32.mrb[0].mxu0
  %v578 = vpop.f32.mrb[0].mxu0
  %579 = vdwg.mxu0
  %580 = vst [vmem:[%s3] sm:$0xff] %v574
  %581 = vst [vmem:[%s3 + $0x8] sm:$0xff] %v576
  // Predicated region
  $region14: #{mask_forward.1} parent=0 // pred_check
    _
  $region15: #{mask_forward.1} parent=0 // pred_check_branch
    %583 = sbr.rel (0) target = $region17
  $region16: #{mask_forward.1} parent=0 // pred_region
    _
  $region17: #{mask_forward.1} parent=0 // pred_fallthru
    _
  // Predicated region
  $region18: #{mask_forward.1} parent=0 // pred_check
    _
  $region19: #{mask_forward.1} parent=0 // pred_check_branch
    %585 = sbr.rel (0) target = $region21
  $region20: #{mask_forward.1} parent=0 // pred_region
    _
  $region21: #{mask_forward.1} parent=0 // pred_fallthru
    _

</llo_original>
